<compile_context>
chip_gen: v6e
topology: v6e:2x2x1
jax: 0.10.0
libtpu: 0.0.40
codegen_flags: <defaults>
</compile_context>

<pallas_src>
import functools

import jax
import jax.numpy as jnp
from jax.experimental import pallas as pl
from jax.experimental.pallas import tpu as pltpu

_LANE = 128
_SUBLANE_BF16 = 16          # bf16 packs 2 rows/sublane -> (16,128) native tile
_VMEM_LIMIT = 64 * 1024 * 1024


def _round_up(n, m):
    return ((n + m - 1) // m) * m


# --------------------------------------------------------------------------
# Pass 1: Q / K / K^T / V projections (gridded over sequence tiles).
# --------------------------------------------------------------------------
def _projection_kernel(x_ref,
                       wq_ref, bq_ref, wk_ref, bk_ref, wv_ref, bv_ref,
                       q_ref, k_ref, kt_ref, v_ref):
    f32 = jnp.float32
    bf16 = jnp.bfloat16

    x = x_ref[...]                                              # (bs, Dp) bf16

    # scale (1/sqrt(d_internal)) already folded into wq/bq.
    q = jnp.dot(x, wq_ref[...], preferred_element_type=f32) + bq_ref[...]
    k = jnp.dot(x, wk_ref[...], preferred_element_type=f32) + bk_ref[...]
    v = jnp.dot(x, wv_ref[...], preferred_element_type=f32) + bv_ref[...]

    q_ref[...] = q.astype(bf16)
    k_bf = k.astype(bf16)
    k_ref[...] = k_bf
    kt_ref[...] = k_bf.T          # one transpose per row tile (amortized)
    v_ref[...] = v.astype(bf16)


# --------------------------------------------------------------------------
# Pass 2: flash-style attention + fused MLP / residuals.
# grid = (q_tiles, kv_tiles); kv axis is the reduction ("arbitrary") axis.
# --------------------------------------------------------------------------
def _attn_mlp_kernel(seq_len, need_mask,
                     x_ref, q_ref, kt_ref, v_ref,
                     w1_ref, b1_ref, w2_ref, b2_ref,
                     hid_ref,
                     m_sc, l_sc, acc_sc):
    f32 = jnp.float32
    bf16 = jnp.bfloat16
    kv = pl.program_id(1)
    block_kv = kt_ref.shape[1]

    @pl.when(kv == 0)
    def _init():
        m_sc[...] = jnp.full(m_sc.shape, -1e30, f32)
        l_sc[...] = jnp.zeros(l_sc.shape, f32)
        acc_sc[...] = jnp.zeros(acc_sc.shape, f32)

    # (bs, Dip) @ (Dip, bkv) -> plain NN-form MXU matmul (K pre-transposed).
    scores = jnp.dot(q_ref[...], kt_ref[...],
                     preferred_element_type=f32)                # (bs, bkv) f32

    if need_mask:   # static: mask padded key columns with a finite large neg.
        col = jax.lax.broadcasted_iota(jnp.int32, scores.shape, 1) + kv * block_kv
        scores = jnp.where(col < seq_len, scores, -1e30)

    m_new = jnp.maximum(m_sc[...], jnp.max(scores, axis=-1, keepdims=True))
    alpha = jnp.exp(m_sc[...] - m_new)
    p = jnp.exp(scores - m_new)                                 # f32 (v5e-safe)
    l_sc[...] = alpha * l_sc[...] + jnp.sum(p, axis=-1, keepdims=True)
    acc_sc[...] = alpha * acc_sc[...] + jnp.dot(
        p.astype(bf16), v_ref[...], preferred_element_type=f32)
    m_sc[...] = m_new

    @pl.when(kv == pl.num_programs(1) - 1)
    def _finalize():
        h = acc_sc[...] * pl.reciprocal(l_sc[...], approx=True)
        x_res = h + x_ref[...].astype(f32)
        y = jnp.dot(x_res.astype(bf16), w1_ref[...],
                    preferred_element_type=f32) + b1_ref[...]
        y = jnp.maximum(y, 0.0)
        y = jnp.dot(y.astype(bf16), w2_ref[...],
                    preferred_element_type=f32) + b2_ref[...]
        hid_ref[...] = (y + x_res).astype(hid_ref.dtype)


# --------------------------------------------------------------------------
# Host-side wrappers.
# --------------------------------------------------------------------------
def prepare_params(params, d_model, d_internal):
    """One-time prep: fold 1/sqrt(d_internal) into wq/bq, pad feature dims to
    lane multiples, cast weights to bf16 (biases stay f32)."""
    dp = _round_up(d_model, _LANE)
    dip = _round_up(d_internal, _LANE)
    scale = 1.0 / (float(d_internal) ** 0.5)

    def pad2(a, rows, cols):
        return jnp.pad(a, ((0, rows - a.shape[0]), (0, cols - a.shape[1])))

    return dict(
        wq=pad2(params["wq"] * scale, dp, dip).astype(jnp.bfloat16),
        bq=pad2(params["bq"] * scale, 1, dip).astype(jnp.float32),
        wk=pad2(params["wk"], dp, dip).astype(jnp.bfloat16),
        bk=pad2(params["bk"], 1, dip).astype(jnp.float32),
        wv=pad2(params["wv"], dp, dp).astype(jnp.bfloat16),
        bv=pad2(params["bv"], 1, dp).astype(jnp.float32),
        w1=pad2(params["w1"], dp, dp).astype(jnp.bfloat16),
        b1=pad2(params["b1"], 1, dp).astype(jnp.float32),
        w2=pad2(params["w2"], dp, dp).astype(jnp.bfloat16),
        b2=pad2(params["b2"], 1, dp).astype(jnp.float32),
    )


def transformer_layer(x, prepared, d_model, d_internal, *,
                      block_s=128, block_kv=None):
    """x: (S, d_model) f32.  Returns (hidden, k, v) in bf16.

    block_s: query-tile rows. 128 is v5e-optimal; 256 recommended on v6e/v7x
    (kv tiles are streamed, so the larger score tile still fits VMEM)."""
    S, D = x.shape
    assert D == d_model
    dp = prepared["wq"].shape[0]
    dip = prepared["wq"].shape[1]

    block_s = max(_SUBLANE_BF16, min(block_s, _round_up(S, _SUBLANE_BF16)))
    block_s = _round_up(block_s, _SUBLANE_BF16)
    if block_kv is None:
        block_kv = block_s
    block_kv = max(_SUBLANE_BF16, min(block_kv, _round_up(S, _SUBLANE_BF16)))
    block_kv = _round_up(block_kv, _SUBLANE_BF16)

    s_pad = _round_up(S, block_s)
    s_pad = _round_up(s_pad, block_kv)
    num_q = s_pad // block_s
    num_kv = s_pad // block_kv

    x_pad = jnp.pad(x, ((0, s_pad - S), (0, dp - D))).astype(jnp.bfloat16)

    const1 = lambda i: (0, 0)
    row1 = lambda i: (i, 0)
    bs2 = 2  # bytes per bf16 element

    # ---------------- Pass 1: projections (Q, K, K^T, V) ----------------
    proj_flops = 2 * s_pad * dp * (2 * dip + dp)
    proj_bytes = (s_pad * dp * bs2
                  + dp * (2 * dip + dp) * bs2 + (2 * dip + dp) * 4
                  + (3 * s_pad * dip + s_pad * dp) * bs2)

    q_all, k_all, kt_all, v_all = pl.pallas_call(
        _projection_kernel,
        out_shape=(
            jax.ShapeDtypeStruct((s_pad, dip), jnp.bfloat16),   # q (scaled)
            jax.ShapeDtypeStruct((s_pad, dip), jnp.bfloat16),   # k
            jax.ShapeDtypeStruct((dip, s_pad), jnp.bfloat16),   # k^T
            jax.ShapeDtypeStruct((s_pad, dp), jnp.bfloat16),    # v
        ),
        grid=(num_q,),
        in_specs=[
            pl.BlockSpec((block_s, dp), row1),   # x tile
            pl.BlockSpec((dp, dip), const1),     # wq
            pl.BlockSpec((1, dip), const1),      # bq
            pl.BlockSpec((dp, dip), const1),     # wk
            pl.BlockSpec((1, dip), const1),      # bk
            pl.BlockSpec((dp, dp), const1),      # wv
            pl.BlockSpec((1, dp), const1),       # bv
        ],
        out_specs=(
            pl.BlockSpec((block_s, dip), row1),
            pl.BlockSpec((block_s, dip), row1),
            pl.BlockSpec((dip, block_s), lambda i: (0, i)),
            pl.BlockSpec((block_s, dp), row1),
        ),
        compiler_params=pltpu.CompilerParams(
            dimension_semantics=("parallel",),
            vmem_limit_bytes=_VMEM_LIMIT),
        cost_estimate=pl.CostEstimate(
            flops=int(proj_flops), transcendentals=0,
            bytes_accessed=int(proj_bytes)),
    )(x_pad,
      prepared["wq"], prepared["bq"],
      prepared["wk"], prepared["bk"],
      prepared["wv"], prepared["bv"])

    # ---------------- Pass 2: attention + MLP (flash-style) -------------
    qtile = lambda i, j: (i, 0)
    kvcol = lambda i, j: (0, j)
    kvrow = lambda i, j: (j, 0)
    const2 = lambda i, j: (0, 0)

    attn_flops = 2 * s_pad * s_pad * (dip + dp) + 4 * s_pad * dp * dp
    attn_trans = s_pad * s_pad + s_pad * num_kv
    attn_bytes = (s_pad * dp * bs2 + s_pad * dip * bs2
                  + num_q * (s_pad * dip + s_pad * dp) * bs2
                  + 2 * dp * dp * bs2 + 2 * dp * 4
                  + s_pad * dp * bs2)

    hid = pl.pallas_call(
        functools.partial(_attn_mlp_kernel, S, s_pad > S),
        out_shape=jax.ShapeDtypeStruct((s_pad, dp), jnp.bfloat16),
        grid=(num_q, num_kv),
        in_specs=[
            pl.BlockSpec((block_s, dp), qtile),      # x tile (residual)
            pl.BlockSpec((block_s, dip), qtile),     # q tile
            pl.BlockSpec((dip, block_kv), kvcol),    # k^T tile (streamed)
            pl.BlockSpec((block_kv, dp), kvrow),     # v tile   (streamed)
            pl.BlockSpec((dp, dp), const2),          # w1
            pl.BlockSpec((1, dp), const2),           # b1
            pl.BlockSpec((dp, dp), const2),          # w2
            pl.BlockSpec((1, dp), const2),           # b2
        ],
        out_specs=pl.BlockSpec((block_s, dp), qtile),
        scratch_shapes=[
            pltpu.VMEM((block_s, 1), jnp.float32),   # m (running max)
            pltpu.VMEM((block_s, 1), jnp.float32),   # l (running denom)
            pltpu.VMEM((block_s, dp), jnp.float32),  # acc
        ],
        compiler_params=pltpu.CompilerParams(
            dimension_semantics=("parallel", "arbitrary"),
            vmem_limit_bytes=_VMEM_LIMIT),
        cost_estimate=pl.CostEstimate(
            flops=int(attn_flops), transcendentals=int(attn_trans),
            bytes_accessed=int(attn_bytes)),
    )(x_pad, q_all, kt_all, v_all,
      prepared["w1"], prepared["b1"], prepared["w2"], prepared["b2"])

    return (hid[:S, :d_model],
            k_all[:S, :d_internal],
            v_all[:S, :d_model])


# --------------------------------------------------------------------------
# Synthetic init + pure-JAX reference (matches the PyTorch forward math).
# --------------------------------------------------------------------------
def init_params(key, d_model, d_internal):
    ks = jax.random.split(key, 10)

    def lin(wk, bk, fan_in, fan_out):
        bound = 1.0 / (fan_in ** 0.5)
        # PyTorch stores weight as (out, in); we transpose to (in, out).
        w = jax.random.uniform(wk, (fan_out, fan_in), jnp.float32, -bound, bound).T
        b = jax.random.uniform(bk, (1, fan_out), jnp.float32, -bound, bound)
        return w, b

    wq, bq = lin(ks[0], ks[1], d_model, d_internal)
    wk, bk = lin(ks[2], ks[3], d_model, d_internal)
    wv, bv = lin(ks[4], ks[5], d_model, d_model)
    w1, b1 = lin(ks[6], ks[7], d_model, d_model)
    w2, b2 = lin(ks[8], ks[9], d_model, d_model)
    return dict(wq=wq, bq=bq, wk=wk, bk=bk, wv=wv, bv=bv,
                w1=w1, b1=b1, w2=w2, b2=b2)


def reference_forward(x, p, d_internal):
    """Pure-JAX reference (f32 math, bf16-rounded matmul inputs like the kernel)."""
    bf = lambda a: a.astype(jnp.bfloat16).astype(jnp.float32)
    xb = bf(x)
    q = xb @ bf(p["wq"]) + p["bq"]
    k = xb @ bf(p["wk"]) + p["bk"]
    v = xb @ bf(p["wv"]) + p["bv"]
    att = (q @ k.T) / (d_internal ** 0.5)
    sm = jax.nn.softmax(att, axis=-1)
    h = sm @ v
    x_res = h + xb
    y = jnp.maximum(x_res @ bf(p["w1"]) + p["b1"], 0.0)
    y = y @ bf(p["w2"]) + p["b2"]
    return y + x_res, k, v


if __name__ == "__main__":
    # TODO(synk): the module's data[k]/weight_home/cache plumbing is host-side
    # orchestration; only the forward math (QKV, attention, MLP) is kernelized.
    S, D_MODEL, D_INTERNAL = 8, 32, 16

    key = jax.random.PRNGKey(0)
    kx, kp = jax.random.split(key)
    x = jax.random.normal(kx, (S, D_MODEL), jnp.float32)
    params = init_params(kp, D_MODEL, D_INTERNAL)
    prepared = prepare_params(params, D_MODEL, D_INTERNAL)

    hidden, k_out, v_out = transformer_layer(x, prepared, D_MODEL, D_INTERNAL)
    jax.block_until_ready((hidden, k_out, v_out))

    ref_hidden, ref_k, ref_v = reference_forward(x, params, D_INTERNAL)
    # bf16 matmul inputs + bf16 outputs -> relaxed tolerances.
    assert jnp.allclose(hidden.astype(jnp.float32), ref_hidden, atol=5e-2, rtol=5e-2)
    assert jnp.allclose(k_out.astype(jnp.float32), ref_k, atol=5e-2, rtol=5e-2)
    assert jnp.allclose(v_out.astype(jnp.float32), ref_v, atol=5e-2, rtol=5e-2)

    print("KERNEL_OK")
</pallas_src>

<mosaic_0001>
module attributes {stable_mosaic.version = 11 : i64} {
  func.func @_projection_kernel(%arg0: i32, %arg1: memref<16x128xbf16, #tpu.memory_space<vmem>>, %arg2: memref<128x128xbf16, #tpu.memory_space<vmem>>, %arg3: memref<1x128xf32, #tpu.memory_space<vmem>>, %arg4: memref<128x128xbf16, #tpu.memory_space<vmem>>, %arg5: memref<1x128xf32, #tpu.memory_space<vmem>>, %arg6: memref<128x128xbf16, #tpu.memory_space<vmem>>, %arg7: memref<1x128xf32, #tpu.memory_space<vmem>>, %arg8: memref<16x128xbf16, #tpu.memory_space<vmem>>, %arg9: memref<16x128xbf16, #tpu.memory_space<vmem>>, %arg10: memref<128x16xbf16, #tpu.memory_space<vmem>>, %arg11: memref<16x128xbf16, #tpu.memory_space<vmem>>) attributes {dimension_semantics = [#tpu.dimension_semantics<parallel>], iteration_bounds = array<i64: 1>, scalar_prefetch = 0 : i64, scratch_operands = 0 : i64, tpu.core_type = #tpu.core_type<tc>, window_params = [{transform_indices = @transform_0, window_bounds = array<i64: 16, 128>}, {pipeline_mode = #tpu.pipeline_mode<synchronous>, transform_indices = @transform_1, window_bounds = array<i64: 128, 128>}, {pipeline_mode = #tpu.pipeline_mode<synchronous>, transform_indices = @transform_2, window_bounds = array<i64: 1, 128>}, {pipeline_mode = #tpu.pipeline_mode<synchronous>, transform_indices = @transform_3, window_bounds = array<i64: 128, 128>}, {pipeline_mode = #tpu.pipeline_mode<synchronous>, transform_indices = @transform_4, window_bounds = array<i64: 1, 128>}, {pipeline_mode = #tpu.pipeline_mode<synchronous>, transform_indices = @transform_5, window_bounds = array<i64: 128, 128>}, {pipeline_mode = #tpu.pipeline_mode<synchronous>, transform_indices = @transform_6, window_bounds = array<i64: 1, 128>}, {transform_indices = @transform_7, window_bounds = array<i64: 16, 128>}, {transform_indices = @transform_8, window_bounds = array<i64: 16, 128>}, {transform_indices = @transform_9, window_bounds = array<i64: 128, 16>}, {transform_indices = @transform_10, window_bounds = array<i64: 16, 128>}]} {
    %c0 = arith.constant 0 : index
    %c0_0 = arith.constant 0 : index
    %0 = vector.load %arg1[%c0, %c0_0] : memref<16x128xbf16, #tpu.memory_space<vmem>>, vector<16x128xbf16>
    %c0_1 = arith.constant 0 : index
    %c0_2 = arith.constant 0 : index
    %1 = vector.load %arg2[%c0_1, %c0_2] : memref<128x128xbf16, #tpu.memory_space<vmem>>, vector<128x128xbf16>
    %cst = arith.constant dense<0.000000e+00> : vector<16x128xf32>
    %2 = tpu.matmul %0, %1, %cst {dimension_numbers = #tpu.dot_dimension_numbers<[1], [0], [0], [1], [0, 0, 1, 1], [], []>} : vector<16x128xbf16>, vector<128x128xbf16>, vector<16x128xf32> -> vector<16x128xf32>
    %c0_3 = arith.constant 0 : index
    %c0_4 = arith.constant 0 : index
    %3 = vector.load %arg3[%c0_3, %c0_4] : memref<1x128xf32, #tpu.memory_space<vmem>>, vector<1x128xf32>
    %4 = vector.broadcast %3 : vector<1x128xf32> to vector<16x128xf32>
    %5 = arith.addf %2, %4 : vector<16x128xf32>
    %c0_5 = arith.constant 0 : index
    %c0_6 = arith.constant 0 : index
    %6 = vector.load %arg4[%c0_5, %c0_6] : memref<128x128xbf16, #tpu.memory_space<vmem>>, vector<128x128xbf16>
    %cst_7 = arith.constant dense<0.000000e+00> : vector<16x128xf32>
    %7 = tpu.matmul %0, %6, %cst_7 {dimension_numbers = #tpu.dot_dimension_numbers<[1], [0], [0], [1], [0, 0, 1, 1], [], []>} : vector<16x128xbf16>, vector<128x128xbf16>, vector<16x128xf32> -> vector<16x128xf32>
    %c0_8 = arith.constant 0 : index
    %c0_9 = arith.constant 0 : index
    %8 = vector.load %arg5[%c0_8, %c0_9] : memref<1x128xf32, #tpu.memory_space<vmem>>, vector<1x128xf32>
    %9 = vector.broadcast %8 : vector<1x128xf32> to vector<16x128xf32>
    %10 = arith.addf %7, %9 : vector<16x128xf32>
    %c0_10 = arith.constant 0 : index
    %c0_11 = arith.constant 0 : index
    %11 = vector.load %arg6[%c0_10, %c0_11] : memref<128x128xbf16, #tpu.memory_space<vmem>>, vector<128x128xbf16>
    %cst_12 = arith.constant dense<0.000000e+00> : vector<16x128xf32>
    %12 = tpu.matmul %0, %11, %cst_12 {dimension_numbers = #tpu.dot_dimension_numbers<[1], [0], [0], [1], [0, 0, 1, 1], [], []>} : vector<16x128xbf16>, vector<128x128xbf16>, vector<16x128xf32> -> vector<16x128xf32>
    %c0_13 = arith.constant 0 : index
    %c0_14 = arith.constant 0 : index
    %13 = vector.load %arg7[%c0_13, %c0_14] : memref<1x128xf32, #tpu.memory_space<vmem>>, vector<1x128xf32>
    %14 = vector.broadcast %13 : vector<1x128xf32> to vector<16x128xf32>
    %15 = arith.addf %12, %14 : vector<16x128xf32>
    %16 = arith.truncf %5 : vector<16x128xf32> to vector<16x128xbf16>
    %c0_15 = arith.constant 0 : index
    %c0_16 = arith.constant 0 : index
    %17 = vector.load %arg8[%c0_15, %c0_16] : memref<16x128xbf16, #tpu.memory_space<vmem>>, vector<16x128xbf16>
    tpu.vector_store %arg8[%c0_15, %c0_16], %16 {strides = array<i32>} : memref<16x128xbf16, #tpu.memory_space<vmem>>, vector<16x128xbf16>,
    %18 = arith.truncf %10 : vector<16x128xf32> to vector<16x128xbf16>
    %c0_17 = arith.constant 0 : index
    %c0_18 = arith.constant 0 : index
    %19 = vector.load %arg9[%c0_17, %c0_18] : memref<16x128xbf16, #tpu.memory_space<vmem>>, vector<16x128xbf16>
    tpu.vector_store %arg9[%c0_17, %c0_18], %18 {strides = array<i32>} : memref<16x128xbf16, #tpu.memory_space<vmem>>, vector<16x128xbf16>,
    %20 = tpu.transpose %18, [1, 0] : vector<16x128xbf16> -> vector<128x16xbf16>
    %c0_19 = arith.constant 0 : index
    %c0_20 = arith.constant 0 : index
    %21 = vector.load %arg10[%c0_19, %c0_20] : memref<128x16xbf16, #tpu.memory_space<vmem>>, vector<128x16xbf16>
    tpu.vector_store %arg10[%c0_19, %c0_20], %20 {strides = array<i32>} : memref<128x16xbf16, #tpu.memory_space<vmem>>, vector<128x16xbf16>,
    %22 = arith.truncf %15 : vector<16x128xf32> to vector<16x128xbf16>
    %c0_21 = arith.constant 0 : index
    %c0_22 = arith.constant 0 : index
    %23 = vector.load %arg11[%c0_21, %c0_22] : memref<16x128xbf16, #tpu.memory_space<vmem>>, vector<16x128xbf16>
    tpu.vector_store %arg11[%c0_21, %c0_22], %22 {strides = array<i32>} : memref<16x128xbf16, #tpu.memory_space<vmem>>, vector<16x128xbf16>,
    return
  }
  func.func @transform_0(%arg0: i32) -> (i32, i32) {
    %c0_i32 = arith.constant 0 : i32
    %c0_i32_0 = arith.constant 0 : i32
    return %arg0, %c0_i32 : i32, i32
  }
  func.func @transform_1(%arg0: i32) -> (i32, i32) {
    %c0_i32 = arith.constant 0 : i32
    %c0_i32_0 = arith.constant 0 : i32
    %c0_i32_1 = arith.constant 0 : i32
    return %c0_i32, %c0_i32_0 : i32, i32
  }
  func.func @transform_2(%arg0: i32) -> (i32, i32) {
    %c0_i32 = arith.constant 0 : i32
    %c0_i32_0 = arith.constant 0 : i32
    %c0_i32_1 = arith.constant 0 : i32
    return %c0_i32, %c0_i32_0 : i32, i32
  }
  func.func @transform_3(%arg0: i32) -> (i32, i32) {
    %c0_i32 = arith.constant 0 : i32
    %c0_i32_0 = arith.constant 0 : i32
    %c0_i32_1 = arith.constant 0 : i32
    return %c0_i32, %c0_i32_0 : i32, i32
  }
  func.func @transform_4(%arg0: i32) -> (i32, i32) {
    %c0_i32 = arith.constant 0 : i32
    %c0_i32_0 = arith.constant 0 : i32
    %c0_i32_1 = arith.constant 0 : i32
    return %c0_i32, %c0_i32_0 : i32, i32
  }
  func.func @transform_5(%arg0: i32) -> (i32, i32) {
    %c0_i32 = arith.constant 0 : i32
    %c0_i32_0 = arith.constant 0 : i32
    %c0_i32_1 = arith.constant 0 : i32
    return %c0_i32, %c0_i32_0 : i32, i32
  }
  func.func @transform_6(%arg0: i32) -> (i32, i32) {
    %c0_i32 = arith.constant 0 : i32
    %c0_i32_0 = arith.constant 0 : i32
    %c0_i32_1 = arith.constant 0 : i32
    return %c0_i32, %c0_i32_0 : i32, i32
  }
  func.func @transform_7(%arg0: i32) -> (i32, i32) {
    %c0_i32 = arith.constant 0 : i32
    %c0_i32_0 = arith.constant 0 : i32
    return %arg0, %c0_i32 : i32, i32
  }
  func.func @transform_8(%arg0: i32) -> (i32, i32) {
    %c0_i32 = arith.constant 0 : i32
    %c0_i32_0 = arith.constant 0 : i32
    return %arg0, %c0_i32 : i32, i32
  }
  func.func @transform_9(%arg0: i32) -> (i32, i32) {
    %c0_i32 = arith.constant 0 : i32
    %c0_i32_0 = arith.constant 0 : i32
    return %c0_i32, %arg0 : i32, i32
  }
  func.func @transform_10(%arg0: i32) -> (i32, i32) {
    %c0_i32 = arith.constant 0 : i32
    %c0_i32_0 = arith.constant 0 : i32
    return %arg0, %c0_i32 : i32, i32
  }
}

</mosaic_0001>

<llo_original>
// kernel: tpu_custom_call.1
$region0: #{tpu_custom_call.1}
  #allocation0 [shape = 'u32[]', space=smem, size = 0x4, offset = 0x4, fixed_abs, tag = 'smem constant byte address 0x4 - core index']
  #allocation1 [shape = 'u32[144,128]{1,0:T(1,128)}', space=vmem, size = 0x12000, scoped, tag = 'internal scratch']
  %s0 = inlined_call_operand.hbm [shape: bf16[16,128], index: 0, kind: input, shape index: {}]
  %s1 = inlined_call_operand.hbm [shape: bf16[128,128], index: 1, kind: input, shape index: {}]
  %s2 = inlined_call_operand.vmem [shape: f32[1,128], index: 2, kind: input, shape index: {}]
  %s3 = inlined_call_operand.hbm [shape: bf16[128,128], index: 3, kind: input, shape index: {}]
  %s4 = inlined_call_operand.vmem [shape: f32[1,128], index: 4, kind: input, shape index: {}]
  %s5 = inlined_call_operand.hbm [shape: bf16[128,128], index: 5, kind: input, shape index: {}]
  %s6 = inlined_call_operand.vmem [shape: f32[1,128], index: 6, kind: input, shape index: {}]
  %s7 = inlined_call_operand.hbm [shape: bf16[16,128], index: 7, kind: output, shape index: {0}]
  %s8 = inlined_call_operand.hbm [shape: bf16[16,128], index: 8, kind: output, shape index: {1}]
  %s9 = inlined_call_operand.vmem [shape: bf16[128,16], index: 9, kind: output, shape index: {2}]
  %s10 = inlined_call_operand.hbm [shape: bf16[16,128], index: 10, kind: output, shape index: {3}]
  %11 = xla_tuple %s7, %s8, %s9, %s10
  %s12 = sld [smem:[#allocation0]]
  $region78: #{tpu_custom_call.1} parent=0
    _
  %s14 = ssub.s32 1, %s12
  %s15 = scalar_select 0, %s14, %s12
  $region1: #{tpu_custom_call.1} parent=0
    #allocation2 [shape = 'u8[4096]{0}', space=vmem, size = 0x1000, scoped, tag = 'input window, operand 0, single buffered']
    #allocation3 [shape = 's32[1]{0}', space=sflag, size = 0x4, scoped, tag = 'scoped memory for tpu_custom_call.1']
    #allocation4 [shape = 's32[1]{0}', space=sflag, size = 0x4, scoped, tag = 'scoped memory for tpu_custom_call.1']
    #allocation5 [shape = 'u8[32768]{0}', space=vmem, size = 0x8000, scoped, tag = 'input window, operand 1, single buffered']
    #allocation6 [shape = 's32[1]{0}', space=sflag, size = 0x4, scoped, tag = 'scoped memory for tpu_custom_call.1']
    #allocation7 [shape = 'u8[32768]{0}', space=vmem, size = 0x8000, scoped, tag = 'input window, operand 3, single buffered']
    #allocation8 [shape = 'u8[32768]{0}', space=vmem, size = 0x8000, scoped, tag = 'input window, operand 5, single buffered']
    #allocation9 [shape = 's32[1]{0}', space=sflag, size = 0x4, scoped, tag = 'scoped memory for tpu_custom_call.1']
    #allocation10 [shape = 'u8[4096]{0}', space=vmem, size = 0x1000, scoped, tag = 'output window, operand 0, single buffered']
    #allocation11 [shape = 'u8[4096]{0}', space=vmem, size = 0x1000, scoped, tag = 'output window, operand 1, single buffered']
    #allocation12 [shape = 's32[1]{0}', space=sflag, size = 0x4, scoped, tag = 'scoped memory for tpu_custom_call.1']
    #allocation13 [shape = 'u8[4096]{0}', space=vmem, size = 0x1000, scoped, tag = 'output window, operand 3, single buffered']
    %16 = vsyncpa [#allocation3], 0
    %17 = vsyncpa [#allocation6], 0
    %18 = vsyncpa [#allocation9], 0
    %19 = vsyncpa [#allocation4], 0
    %20 = vsyncpa [#allocation12], 0
    // Predicated region
    $region2: #{tpu_custom_call.1} parent=1 // pred_check
      _
    $region3: #{tpu_custom_call.1} parent=1 // pred_check_branch
      %22 = sbr.rel (0) target = $region5
    $region4: #{tpu_custom_call.1} parent=1 // pred_region
      %s24 = ssub.s32 128, 128
      %25 = vsyncadd [#allocation3], %s24
      %s26 = sshll.u32 [#allocation2], 4
      %s27 = int_to_ptr.vmem [resolvable:$true] %s26
      %32 = dma.hbm_to_vmem [thread:$0]  %s0, 128, %s27, [#allocation3], 64, 64, 4
    $region5: #{tpu_custom_call.1} parent=1 // pred_fallthru
      _
    // Predicated region
    $region6: #{tpu_custom_call.1} parent=1 // pred_check
      _
    $region7: #{tpu_custom_call.1} parent=1 // pred_check_branch
      %34 = sbr.rel (0) target = $region9
    $region8: #{tpu_custom_call.1} parent=1 // pred_region
      %s36 = ssub.s32 1024, 1024
      %37 = vsyncadd [#allocation6], %s36
      %s38 = sshll.u32 [#allocation5], 4
      %s39 = int_to_ptr.vmem [resolvable:$true] %s38
      %44 = dma.hbm_to_vmem [thread:$0]  %s1, 1024, %s39, [#allocation6], 64, 64, 4
    $region9: #{tpu_custom_call.1} parent=1 // pred_fallthru
      _
    // Predicated region
    $region10: #{tpu_custom_call.1} parent=1 // pred_check
      _
    $region11: #{tpu_custom_call.1} parent=1 // pred_check_branch
      %46 = sbr.rel (0) target = $region13
    $region12: #{tpu_custom_call.1} parent=1 // pred_region
      _
    $region13: #{tpu_custom_call.1} parent=1 // pred_fallthru
      _
    // Predicated region
    $region14: #{tpu_custom_call.1} parent=1 // pred_check
      _
    $region15: #{tpu_custom_call.1} parent=1 // pred_check_branch
      %48 = sbr.rel (0) target = $region17
    $region16: #{tpu_custom_call.1} parent=1 // pred_region
      %s50 = ssub.s32 1024, 1024
      %51 = vsyncadd [#allocation6], %s50
      %s52 = sshll.u32 [#allocation7], 4
      %s53 = int_to_ptr.vmem [resolvable:$true] %s52
      %58 = dma.hbm_to_vmem [thread:$0]  %s3, 1024, %s53, [#allocation6], 64, 64, 4
    $region17: #{tpu_custom_call.1} parent=1 // pred_fallthru
      _
    // Predicated region
    $region18: #{tpu_custom_call.1} parent=1 // pred_check
      _
    $region19: #{tpu_custom_call.1} parent=1 // pred_check_branch
      %60 = sbr.rel (0) target = $region21
    $region20: #{tpu_custom_call.1} parent=1 // pred_region
      _
    $region21: #{tpu_custom_call.1} parent=1 // pred_fallthru
      _
    // Predicated region
    $region22: #{tpu_custom_call.1} parent=1 // pred_check
      _
    $region23: #{tpu_custom_call.1} parent=1 // pred_check_branch
      %62 = sbr.rel (0) target = $region25
    $region24: #{tpu_custom_call.1} parent=1 // pred_region
      %s64 = ssub.s32 1024, 1024
      %65 = vsyncadd [#allocation9], %s64
      %s66 = sshll.u32 [#allocation8], 4
      %s67 = int_to_ptr.vmem [resolvable:$true] %s66
      %72 = dma.hbm_to_vmem [thread:$0]  %s5, 1024, %s67, [#allocation9], 64, 64, 4
    $region25: #{tpu_custom_call.1} parent=1 // pred_fallthru
      _
    // Predicated region
    $region26: #{tpu_custom_call.1} parent=1 // pred_check
      _
    $region27: #{tpu_custom_call.1} parent=1 // pred_check_branch
      %74 = sbr.rel (0) target = $region29
    $region28: #{tpu_custom_call.1} parent=1 // pred_region
      _
    $region29: #{tpu_custom_call.1} parent=1 // pred_fallthru
      _
    // Predicated region
    $region30: #{tpu_custom_call.1} parent=1 // pred_check
      _
    $region31: #{tpu_custom_call.1} parent=1 // pred_check_branch
      %76 = sbr.rel (0) target = $region33
    $region32: #{tpu_custom_call.1} parent=1 // pred_region
      %77 = dma.done [#allocation3], 128
    $region33: #{tpu_custom_call.1} parent=1 // pred_fallthru
      _
    // Predicated region
    $region34: #{tpu_custom_call.1} parent=1 // pred_check
      _
    $region35: #{tpu_custom_call.1} parent=1 // pred_check_branch
      %79 = sbr.rel (0) target = $region37
    $region36: #{tpu_custom_call.1} parent=1 // pred_region
      %80 = dma.done [#allocation6], 1024
    $region37: #{tpu_custom_call.1} parent=1 // pred_fallthru
      _
    // Predicated region
    $region38: #{tpu_custom_call.1} parent=1 // pred_check
      _
    $region39: #{tpu_custom_call.1} parent=1 // pred_check_branch
      %82 = sbr.rel (0) target = $region41
    $region40: #{tpu_custom_call.1} parent=1 // pred_region
      %83 = dma.done [#allocation6], 1024
    $region41: #{tpu_custom_call.1} parent=1 // pred_fallthru
      _
    // Predicated region
    $region42: #{tpu_custom_call.1} parent=1 // pred_check
      _
    $region43: #{tpu_custom_call.1} parent=1 // pred_check_branch
      %85 = sbr.rel (0) target = $region45
    $region44: #{tpu_custom_call.1} parent=1 // pred_region
      %86 = dma.done [#allocation9], 1024
    $region45: #{tpu_custom_call.1} parent=1 // pred_fallthru
      _
    %v88 = vld [vmem:[#allocation2] sm:$0xf]
    %v89 = vld [vmem:[#allocation2 + $0x4] sm:$0xf]
    %v90 = vld [vmem:[#allocation5] sm:$0xf]
    %v91 = vld [vmem:[#allocation5 + $0x4] sm:$0xf]
    %v92 = vld [vmem:[#allocation5 + $0x8] sm:$0xf]
    %v93 = vld [vmem:[#allocation5 + $0xc] sm:$0xf]
    %v94 = vld [vmem:[#allocation5 + $0x10] sm:$0xf]
    %v95 = vld [vmem:[#allocation5 + $0x14] sm:$0xf]
    %v96 = vld [vmem:[#allocation5 + $0x18] sm:$0xf]
    %v97 = vld [vmem:[#allocation5 + $0x1c] sm:$0xf]
    %v98 = vld [vmem:[#allocation5 + $0x20] sm:$0xf]
    %v99 = vld [vmem:[#allocation5 + $0x24] sm:$0xf]
    %v100 = vld [vmem:[#allocation5 + $0x28] sm:$0xf]
    %v101 = vld [vmem:[#allocation5 + $0x2c] sm:$0xf]
    %v102 = vld [vmem:[#allocation5 + $0x30] sm:$0xf]
    %v103 = vld [vmem:[#allocation5 + $0x34] sm:$0xf]
    %v104 = vld [vmem:[#allocation5 + $0x38] sm:$0xf]
    %v105 = vld [vmem:[#allocation5 + $0x3c] sm:$0xf]
    %v106 = vld [vmem:[%s2] sm:$0x1]
    %v108 = vlaneseq
    %v109 = vshrl.u32 %v108, 7
    %v110 = vsub.s32 0, %v109
    %v111 = vrot.slane %v106, %v110
    %v115 = vunpack.c.l.b16 %v88
    %v116 = vunpack.c.l.b16 %v89
    %v117 = vpack.c.b16 %v116, %v115
    %v135 = vunpack.c.l.b16 %v90
    %v136 = vunpack.c.l.b16 %v91
    %v137 = vunpack.c.l.b16 %v92
    %v138 = vunpack.c.l.b16 %v93
    %v139 = vunpack.c.l.b16 %v94
    %v140 = vunpack.c.l.b16 %v95
    %v141 = vunpack.c.l.b16 %v96
    %v142 = vunpack.c.l.b16 %v97
    %v143 = vunpack.c.l.b16 %v98
    %v144 = vunpack.c.l.b16 %v99
    %v145 = vunpack.c.l.b16 %v100
    %v146 = vunpack.c.l.b16 %v101
    %v147 = vunpack.c.l.b16 %v102
    %v148 = vunpack.c.l.b16 %v103
    %v149 = vunpack.c.l.b16 %v104
    %v150 = vunpack.c.l.b16 %v105
    %v151 = vpack.c.b16 %v136, %v135
    %v152 = vpack.c.b16 %v138, %v137
    %v153 = vpack.c.b16 %v140, %v139
    %v154 = vpack.c.b16 %v142, %v141
    %v155 = vpack.c.b16 %v144, %v143
    %v156 = vpack.c.b16 %v146, %v145
    %v157 = vpack.c.b16 %v148, %v147
    %v158 = vpack.c.b16 %v150, %v149
    %167 = vmatprep.subr.bf16.mxu0 0
    %168 = vmatpush1.bf16.msra.mxu0 %v158
    %169 = vmatprep.subr.bf16.mxu0 0
    %170 = vmatpush1.bf16.msra.mxu0 %v157
    %171 = vmatprep.subr.bf16.mxu0 0
    %172 = vmatpush1.bf16.msra.mxu0 %v156
    %173 = vmatprep.subr.bf16.mxu0 0
    %174 = vmatpush1.bf16.msra.mxu0 %v155
    %175 = vmatprep.subr.bf16.mxu0 0
    %176 = vmatpush1.bf16.msra.mxu0 %v154
    %177 = vmatprep.subr.bf16.mxu0 0
    %178 = vmatpush1.bf16.msra.mxu0 %v153
    %179 = vmatprep.subr.bf16.mxu0 0
    %180 = vmatpush1.bf16.msra.mxu0 %v152
    %181 = vmatprep.subr.bf16.mxu0 0
    %182 = vmatpush1.bf16.msra.mxu0 %v151
    %183 = vmatprep.subr.bf16.mxu0 0
    %184 = vmatpush2.bf16.msra.mxu0 0
    %185 = vmatprep.subr.bf16.mxu0 0
    %186 = vmatpush2.bf16.msra.mxu0 0
    %187 = vmatprep.subr.bf16.mxu0 0
    %188 = vmatpush2.bf16.msra.mxu0 0
    %189 = vmatprep.subr.bf16.mxu0 0
    %190 = vmatpush2.bf16.msra.mxu0 0
    %191 = vmatprep.subr.bf16.mxu0 0
    %192 = vmatpush2.bf16.msra.mxu0 0
    %193 = vmatprep.subr.bf16.mxu0 0
    %194 = vmatpush2.bf16.msra.mxu0 0
    %195 = vmatprep.subr.bf16.mxu0 0
    %196 = vmatpush2.bf16.msra.mxu0 0
    %197 = vmatprep.subr.bf16.mxu0 0
    %198 = vmatpush2.bf16.msra.mxu0 0
    %199 = vmatprep.mubr.bf16.mxu0 0
    %200 = vmatmul.mubr.bf16.gmra.mxu0 %v117
    %v201 = vpop.f32.mrf.mxu0
    %v202 = vadd.f32 %v111, %v201
    %v203 = vpop.f32.mrf.mxu0
    %v204 = vpop.f32.mrf.mxu0
    %v205 = vadd.f32 %v111, %v204
    %v206 = vpop.f32.mrf.mxu0
    %207 = vdwg.mxu0
    %v208 = vld [vmem:[#allocation7] sm:$0xf]
    %v209 = vld [vmem:[#allocation7 + $0x4] sm:$0xf]
    %v210 = vld [vmem:[#allocation7 + $0x8] sm:$0xf]
    %v211 = vld [vmem:[#allocation7 + $0xc] sm:$0xf]
    %v212 = vld [vmem:[#allocation7 + $0x10] sm:$0xf]
    %v213 = vld [vmem:[#allocation7 + $0x14] sm:$0xf]
    %v214 = vld [vmem:[#allocation7 + $0x18] sm:$0xf]
    %v215 = vld [vmem:[#allocation7 + $0x1c] sm:$0xf]
    %v216 = vld [vmem:[#allocation7 + $0x20] sm:$0xf]
    %v217 = vld [vmem:[#allocation7 + $0x24] sm:$0xf]
    %v218 = vld [vmem:[#allocation7 + $0x28] sm:$0xf]
    %v219 = vld [vmem:[#allocation7 + $0x2c] sm:$0xf]
    %v220 = vld [vmem:[#allocation7 + $0x30] sm:$0xf]
    %v221 = vld [vmem:[#allocation7 + $0x34] sm:$0xf]
    %v222 = vld [vmem:[#allocation7 + $0x38] sm:$0xf]
    %v223 = vld [vmem:[#allocation7 + $0x3c] sm:$0xf]
    %v224 = vld [vmem:[%s4] sm:$0x1]
    %v226 = vlaneseq
    %v227 = vshrl.u32 %v226, 7
    %v228 = vsub.s32 0, %v227
    %v229 = vrot.slane %v224, %v228
    %v247 = vunpack.c.l.b16 %v208
    %v248 = vunpack.c.l.b16 %v209
    %v249 = vunpack.c.l.b16 %v210
    %v250 = vunpack.c.l.b16 %v211
    %v251 = vunpack.c.l.b16 %v212
    %v252 = vunpack.c.l.b16 %v213
    %v253 = vunpack.c.l.b16 %v214
    %v254 = vunpack.c.l.b16 %v215
    %v255 = vunpack.c.l.b16 %v216
    %v256 = vunpack.c.l.b16 %v217
    %v257 = vunpack.c.l.b16 %v218
    %v258 = vunpack.c.l.b16 %v219
    %v259 = vunpack.c.l.b16 %v220
    %v260 = vunpack.c.l.b16 %v221
    %v261 = vunpack.c.l.b16 %v222
    %v262 = vunpack.c.l.b16 %v223
    %v263 = vpack.c.b16 %v248, %v247
    %v264 = vpack.c.b16 %v250, %v249
    %v265 = vpack.c.b16 %v252, %v251
    %v266 = vpack.c.b16 %v254, %v253
    %v267 = vpack.c.b16 %v256, %v255
    %v268 = vpack.c.b16 %v258, %v257
    %v269 = vpack.c.b16 %v260, %v259
    %v270 = vpack.c.b16 %v262, %v261
    %279 = vmatprep.subr.bf16.mxu0 0
    %280 = vmatpush1.bf16.msra.mxu0 %v270
    %281 = vmatprep.subr.bf16.mxu0 0
    %282 = vmatpush1.bf16.msra.mxu0 %v269
    %283 = vmatprep.subr.bf16.mxu0 0
    %284 = vmatpush1.bf16.msra.mxu0 %v268
    %285 = vmatprep.subr.bf16.mxu0 0
    %286 = vmatpush1.bf16.msra.mxu0 %v267
    %287 = vmatprep.subr.bf16.mxu0 0
    %288 = vmatpush1.bf16.msra.mxu0 %v266
    %289 = vmatprep.subr.bf16.mxu0 0
    %290 = vmatpush1.bf16.msra.mxu0 %v265
    %291 = vmatprep.subr.bf16.mxu0 0
    %292 = vmatpush1.bf16.msra.mxu0 %v264
    %293 = vmatprep.subr.bf16.mxu0 0
    %294 = vmatpush1.bf16.msra.mxu0 %v263
    %295 = vmatprep.subr.bf16.mxu0 0
    %296 = vmatpush2.bf16.msra.mxu0 0
    %297 = vmatprep.subr.bf16.mxu0 0
    %298 = vmatpush2.bf16.msra.mxu0 0
    %299 = vmatprep.subr.bf16.mxu0 0
    %300 = vmatpush2.bf16.msra.mxu0 0
    %301 = vmatprep.subr.bf16.mxu0 0
    %302 = vmatpush2.bf16.msra.mxu0 0
    %303 = vmatprep.subr.bf16.mxu0 0
    %304 = vmatpush2.bf16.msra.mxu0 0
    %305 = vmatprep.subr.bf16.mxu0 0
    %306 = vmatpush2.bf16.msra.mxu0 0
    %307 = vmatprep.subr.bf16.mxu0 0
    %308 = vmatpush2.bf16.msra.mxu0 0
    %309 = vmatprep.subr.bf16.mxu0 0
    %310 = vmatpush2.bf16.msra.mxu0 0
    %311 = vmatprep.mubr.bf16.mxu0 0
    %312 = vmatmul.mubr.bf16.gmra.mxu0 %v117
    %v313 = vpop.f32.mrf.mxu0
    %v314 = vadd.f32 %v229, %v313
    %v315 = vpop.f32.mrf.mxu0
    %v316 = vpop.f32.mrf.mxu0
    %v317 = vadd.f32 %v229, %v316
    %v318 = vpop.f32.mrf.mxu0
    %319 = vdwg.mxu0
    %v320 = vld [vmem:[#allocation8] sm:$0xf]
    %v321 = vld [vmem:[#allocation8 + $0x4] sm:$0xf]
    %v322 = vld [vmem:[#allocation8 + $0x8] sm:$0xf]
    %v323 = vld [vmem:[#allocation8 + $0xc] sm:$0xf]
    %v324 = vld [vmem:[#allocation8 + $0x10] sm:$0xf]
    %v325 = vld [vmem:[#allocation8 + $0x14] sm:$0xf]
    %v326 = vld [vmem:[#allocation8 + $0x18] sm:$0xf]
    %v327 = vld [vmem:[#allocation8 + $0x1c] sm:$0xf]
    %v328 = vld [vmem:[#allocation8 + $0x20] sm:$0xf]
    %v329 = vld [vmem:[#allocation8 + $0x24] sm:$0xf]
    %v330 = vld [vmem:[#allocation8 + $0x28] sm:$0xf]
    %v331 = vld [vmem:[#allocation8 + $0x2c] sm:$0xf]
    %v332 = vld [vmem:[#allocation8 + $0x30] sm:$0xf]
    %v333 = vld [vmem:[#allocation8 + $0x34] sm:$0xf]
    %v334 = vld [vmem:[#allocation8 + $0x38] sm:$0xf]
    %v335 = vld [vmem:[#allocation8 + $0x3c] sm:$0xf]
    %v336 = vld [vmem:[%s6] sm:$0x1]
    %v338 = vlaneseq
    %v339 = vshrl.u32 %v338, 7
    %v340 = vsub.s32 0, %v339
    %v341 = vrot.slane %v336, %v340
    %v359 = vunpack.c.l.b16 %v320
    %v360 = vunpack.c.l.b16 %v321
    %v361 = vunpack.c.l.b16 %v322
    %v362 = vunpack.c.l.b16 %v323
    %v363 = vunpack.c.l.b16 %v324
    %v364 = vunpack.c.l.b16 %v325
    %v365 = vunpack.c.l.b16 %v326
    %v366 = vunpack.c.l.b16 %v327
    %v367 = vunpack.c.l.b16 %v328
    %v368 = vunpack.c.l.b16 %v329
    %v369 = vunpack.c.l.b16 %v330
    %v370 = vunpack.c.l.b16 %v331
    %v371 = vunpack.c.l.b16 %v332
    %v372 = vunpack.c.l.b16 %v333
    %v373 = vunpack.c.l.b16 %v334
    %v374 = vunpack.c.l.b16 %v335
    %v375 = vpack.c.b16 %v360, %v359
    %v376 = vpack.c.b16 %v362, %v361
    %v377 = vpack.c.b16 %v364, %v363
    %v378 = vpack.c.b16 %v366, %v365
    %v379 = vpack.c.b16 %v368, %v367
    %v380 = vpack.c.b16 %v370, %v369
    %v381 = vpack.c.b16 %v372, %v371
    %v382 = vpack.c.b16 %v374, %v373
    %391 = vmatprep.subr.bf16.mxu0 0
    %392 = vmatpush1.bf16.msra.mxu0 %v382
    %393 = vmatprep.subr.bf16.mxu0 0
    %394 = vmatpush1.bf16.msra.mxu0 %v381
    %395 = vmatprep.subr.bf16.mxu0 0
    %396 = vmatpush1.bf16.msra.mxu0 %v380
    %397 = vmatprep.subr.bf16.mxu0 0
    %398 = vmatpush1.bf16.msra.mxu0 %v379
    %399 = vmatprep.subr.bf16.mxu0 0
    %400 = vmatpush1.bf16.msra.mxu0 %v378
    %401 = vmatprep.subr.bf16.mxu0 0
    %402 = vmatpush1.bf16.msra.mxu0 %v377
    %403 = vmatprep.subr.bf16.mxu0 0
    %404 = vmatpush1.bf16.msra.mxu0 %v376
    %405 = vmatprep.subr.bf16.mxu0 0
    %406 = vmatpush1.bf16.msra.mxu0 %v375
    %407 = vmatprep.subr.bf16.mxu0 0
    %408 = vmatpush2.bf16.msra.mxu0 0
    %409 = vmatprep.subr.bf16.mxu0 0
    %410 = vmatpush2.bf16.msra.mxu0 0
    %411 = vmatprep.subr.bf16.mxu0 0
    %412 = vmatpush2.bf16.msra.mxu0 0
    %413 = vmatprep.subr.bf16.mxu0 0
    %414 = vmatpush2.bf16.msra.mxu0 0
    %415 = vmatprep.subr.bf16.mxu0 0
    %416 = vmatpush2.bf16.msra.mxu0 0
    %417 = vmatprep.subr.bf16.mxu0 0
    %418 = vmatpush2.bf16.msra.mxu0 0
    %419 = vmatprep.subr.bf16.mxu0 0
    %420 = vmatpush2.bf16.msra.mxu0 0
    %421 = vmatprep.subr.bf16.mxu0 0
    %422 = vmatpush2.bf16.msra.mxu0 0
    %423 = vmatprep.mubr.bf16.mxu0 0
    %424 = vmatmul.mubr.bf16.gmra.mxu0 %v117
    %v425 = vpop.f32.mrf.mxu0
    %v426 = vadd.f32 %v341, %v425
    %v427 = vpop.f32.mrf.mxu0
    %v428 = vpop.f32.mrf.mxu0
    %v429 = vadd.f32 %v341, %v428
    %v430 = vpop.f32.mrf.mxu0
    %431 = vdwg.mxu0
    %v432 = vpack.c.bf16 %v205, %v202
    %v434 = vunpack.c.l.b16 %v432
    %v435 = vunpack.c.h.b16 %v432
    %v436 = vpack.c.b16 %v434, %v434
    %v437 = vpack.c.b16 %v435, %v435
    %440 = vst [vmem:[#allocation10] sm:$0xf] %v436
    %441 = vst [vmem:[#allocation10 + $0x4] sm:$0xf] %v437
    %v442 = vpack.c.bf16 %v317, %v314
    %v444 = vunpack.c.l.b16 %v442
    %v445 = vunpack.c.h.b16 %v442
    %v446 = vpack.c.b16 %v444, %v444
    %v447 = vpack.c.b16 %v445, %v445
    %450 = vst [vmem:[#allocation11] sm:$0xf] %v446
    %451 = vst [vmem:[#allocation11 + $0x4] sm:$0xf] %v447
    %452 = vxpose.xlu0.c.b16.start [1/8] %v442, 128
    %453 = vxpose.xlu0.c.b16.cont [2/8] 0, 128
    %454 = vxpose.xlu0.c.b16.cont [3/8] 0, 128
    %455 = vxpose.xlu0.c.b16.cont [4/8] 0, 128
    %456 = vxpose.xlu0.c.b16.cont [5/8] 0, 128
    %457 = vxpose.xlu0.c.b16.cont [6/8] 0, 128
    %458 = vxpose.xlu0.c.b16.cont [7/8] 0, 128
    %459 = vxpose.xlu0.c.b16.end [8/8] 0, 128
    %v460 = vpop.trf.xlu0
    %v461 = vpop.trf.xlu0
    %v462 = vpop.trf.xlu0
    %v463 = vpop.trf.xlu0
    %v464 = vpop.trf.xlu0
    %v465 = vpop.trf.xlu0
    %v466 = vpop.trf.xlu0
    %v467 = vpop.trf.xlu0
    %v476 = vunpack.c.l.b16 %v460
    %v477 = vunpack.c.h.b16 %v460
    %v478 = vunpack.c.l.b16 %v461
    %v479 = vunpack.c.h.b16 %v461
    %v480 = vunpack.c.l.b16 %v462
    %v481 = vunpack.c.h.b16 %v462
    %v482 = vunpack.c.l.b16 %v463
    %v483 = vunpack.c.h.b16 %v463
    %v484 = vunpack.c.l.b16 %v464
    %v485 = vunpack.c.h.b16 %v464
    %v486 = vunpack.c.l.b16 %v465
    %v487 = vunpack.c.h.b16 %v465
    %v488 = vunpack.c.l.b16 %v466
    %v489 = vunpack.c.h.b16 %v466
    %v490 = vunpack.c.l.b16 %v467
    %v491 = vunpack.c.h.b16 %v467
    %v492 = vpack.c.b16 %v476, %v476
    %v493 = vpack.c.b16 %v477, %v477
    %v494 = vpack.c.b16 %v478, %v478
    %v495 = vpack.c.b16 %v479, %v479
    %v496 = vpack.c.b16 %v480, %v480
    %v497 = vpack.c.b16 %v481, %v481
    %v498 = vpack.c.b16 %v482, %v482
    %v499 = vpack.c.b16 %v483, %v483
    %v500 = vpack.c.b16 %v484, %v484
    %v501 = vpack.c.b16 %v485, %v485
    %v502 = vpack.c.b16 %v486, %v486
    %v503 = vpack.c.b16 %v487, %v487
    %v504 = vpack.c.b16 %v488, %v488
    %v505 = vpack.c.b16 %v489, %v489
    %v506 = vpack.c.b16 %v490, %v490
    %v507 = vpack.c.b16 %v491, %v491
    %vm524 = vcmask 125952
    %525 = vst.msk [vmem:[%s9] sm:$0xf] %vm524, %v492
    %526 = vst.msk [vmem:[%s9 + $0x4] sm:$0xf] %vm524, %v493
    %527 = vst.msk [vmem:[%s9 + $0x8] sm:$0xf] %vm524, %v494
    %528 = vst.msk [vmem:[%s9 + $0xc] sm:$0xf] %vm524, %v495
    %529 = vst.msk [vmem:[%s9 + $0x10] sm:$0xf] %vm524, %v496
    %530 = vst.msk [vmem:[%s9 + $0x14] sm:$0xf] %vm524, %v497
    %531 = vst.msk [vmem:[%s9 + $0x18] sm:$0xf] %vm524, %v498
    %532 = vst.msk [vmem:[%s9 + $0x1c] sm:$0xf] %vm524, %v499
    %533 = vst.msk [vmem:[%s9 + $0x20] sm:$0xf] %vm524, %v500
    %534 = vst.msk [vmem:[%s9 + $0x24] sm:$0xf] %vm524, %v501
    %535 = vst.msk [vmem:[%s9 + $0x28] sm:$0xf] %vm524, %v502
    %536 = vst.msk [vmem:[%s9 + $0x2c] sm:$0xf] %vm524, %v503
    %537 = vst.msk [vmem:[%s9 + $0x30] sm:$0xf] %vm524, %v504
    %538 = vst.msk [vmem:[%s9 + $0x34] sm:$0xf] %vm524, %v505
    %539 = vst.msk [vmem:[%s9 + $0x38] sm:$0xf] %vm524, %v506
    %540 = vst.msk [vmem:[%s9 + $0x3c] sm:$0xf] %vm524, %v507
    %v541 = vpack.c.bf16 %v429, %v426
    %v543 = vunpack.c.l.b16 %v541
    %v544 = vunpack.c.h.b16 %v541
    %v545 = vpack.c.b16 %v543, %v543
    %v546 = vpack.c.b16 %v544, %v544
    %549 = vst [vmem:[#allocation13] sm:$0xf] %v545
    %550 = vst [vmem:[#allocation13 + $0x4] sm:$0xf] %v546
    // Predicated region
    $region46: #{tpu_custom_call.1} parent=1 // pred_check
      _
    $region47: #{tpu_custom_call.1} parent=1 // pred_check_branch
      %552 = sbr.rel (0) target = $region49
    $region48: #{tpu_custom_call.1} parent=1 // pred_region
      %s554 = ssub.s32 128, 128
      %555 = vsyncadd [#allocation4], %s554
      %s556 = sshll.u32 [#allocation10], 4
      %s557 = int_to_ptr.vmem [resolvable:$true] %s556
      %562 = dma.vmem_to_hbm [thread:$0]  %s557, 128, %s7, [#allocation4], 64, 64, 4
    $region49: #{tpu_custom_call.1} parent=1 // pred_fallthru
      _
    // Predicated region
    $region50: #{tpu_custom_call.1} parent=1 // pred_check
      _
    $region51: #{tpu_custom_call.1} parent=1 // pred_check_branch
      %564 = sbr.rel (0) target = $region53
    $region52: #{tpu_custom_call.1} parent=1 // pred_region
      %s566 = ssub.s32 128, 128
      %567 = vsyncadd [#allocation12], %s566
      %s568 = sshll.u32 [#allocation11], 4
      %s569 = int_to_ptr.vmem [resolvable:$true] %s568
      %574 = dma.vmem_to_hbm [thread:$0]  %s569, 128, %s8, [#allocation12], 64, 64, 4
    $region53: #{tpu_custom_call.1} parent=1 // pred_fallthru
      _
    // Predicated region
    $region54: #{tpu_custom_call.1} parent=1 // pred_check
      _
    $region55: #{tpu_custom_call.1} parent=1 // pred_check_branch
      %576 = sbr.rel (0) target = $region57
    $region56: #{tpu_custom_call.1} parent=1 // pred_region
      _
    $region57: #{tpu_custom_call.1} parent=1 // pred_fallthru
      _
    // Predicated region
    $region58: #{tpu_custom_call.1} parent=1 // pred_check
      _
    $region59: #{tpu_custom_call.1} parent=1 // pred_check_branch
      %578 = sbr.rel (0) target = $region61
    $region60: #{tpu_custom_call.1} parent=1 // pred_region
      %s580 = ssub.s32 128, 128
      %581 = vsyncadd [#allocation12], %s580
      %s582 = sshll.u32 [#allocation13], 4
      %s583 = int_to_ptr.vmem [resolvable:$true] %s582
      %588 = dma.vmem_to_hbm [thread:$0]  %s583, 128, %s10, [#allocation12], 64, 64, 4
    $region61: #{tpu_custom_call.1} parent=1 // pred_fallthru
      _
    // Predicated region
    $region62: #{tpu_custom_call.1} parent=1 // pred_check
      _
    $region63: #{tpu_custom_call.1} parent=1 // pred_check_branch
      %590 = sbr.rel (0) target = $region65
    $region64: #{tpu_custom_call.1} parent=1 // pred_region
      %591 = dma.done [#allocation4], 128
    $region65: #{tpu_custom_call.1} parent=1 // pred_fallthru
      _
    // Predicated region
    $region66: #{tpu_custom_call.1} parent=1 // pred_check
      _
    $region67: #{tpu_custom_call.1} parent=1 // pred_check_branch
      %593 = sbr.rel (0) target = $region69
    $region68: #{tpu_custom_call.1} parent=1 // pred_region
      %594 = dma.done [#allocation12], 128
    $region69: #{tpu_custom_call.1} parent=1 // pred_fallthru
      _
    // Predicated region
    $region70: #{tpu_custom_call.1} parent=1 // pred_check
      _
    $region71: #{tpu_custom_call.1} parent=1 // pred_check_branch
      %596 = sbr.rel (0) target = $region73
    $region72: #{tpu_custom_call.1} parent=1 // pred_region
      _
    $region73: #{tpu_custom_call.1} parent=1 // pred_fallthru
      _
    // Predicated region
    $region74: #{tpu_custom_call.1} parent=1 // pred_check
      _
    $region75: #{tpu_custom_call.1} parent=1 // pred_check_branch
      %598 = sbr.rel (0) target = $region77
    $region76: #{tpu_custom_call.1} parent=1 // pred_region
      %599 = dma.done [#allocation12], 128
    $region77: #{tpu_custom_call.1} parent=1 // pred_fallthru
      _
    %600 = vsyncpa [#allocation3], 1
    %601 = vsyncpa [#allocation6], 1
    %602 = vsyncpa [#allocation9], 1
    %603 = vsyncpa [#allocation4], 1
    %604 = vsyncpa [#allocation12], 1

</llo_original>
